<compile_context>
chip_gen: v7x
topology: tpu7x:2x2x1
jax: 0.10.0
libtpu: 0.0.40
codegen_flags: <defaults>
</compile_context>

<pallas_src>
import jax
import jax.numpy as jnp
from jax.experimental import pallas as pl
from jax.experimental.pallas import tpu as pltpu

# ---------------------------------------------------------------------------
# Config constants (mirroring Variance.__init__ arguments), fixed in-script.
# ---------------------------------------------------------------------------
SAMPLING_RATE = 24000          # config['preprocess']['audio']['sampling_rate']
HOP_LENGTH = 256               # config['preprocess']['stft']['hop_length']
PITCH_MEAN = 200.0             # pitch_mean
PITCH_STD = 50.0               # pitch_std

VOCAB_PHONEME = 64
VOCAB_ACCENT = 8
NUM_SPEAKERS = 4
HIDDEN = 32

MAX_TILE_M = 2048              # rows (lanes) per grid step


def make_variance_kernel(pitch_mean, pitch_std, inv_frames_per_second):
    """Fused predictor-heads + Variance.forward post-processing kernel.

    Transposed layout: activations are (HIDDEN, TILE_M) with time on lanes,
    output block is (2, TILE_M): row 0 = pitch, row 1 = duration.
    """

    def kernel(h_ref, w1_ref, b1_ref, wh_ref, bh_ref, out_ref):
        h = h_ref[...].astype(jnp.float32)                       # (H, TILE_M)

        # one-layer "encoder" (transposed): z^T = tanh(W1^T h^T + b1^T)
        z = jnp.tanh(
            jnp.dot(w1_ref[...], h, preferred_element_type=jnp.float32)
            + b1_ref[...]
        )                                                        # (H, TILE_M)

        # pitch / duration heads fused into one (2, H) @ (H, TILE_M) matmul
        y = (jnp.dot(wh_ref[...], z, preferred_element_type=jnp.float32)
             + bh_ref[...])                                      # (2, TILE_M)

        pitch_norm = jnp.tanh(y[0:1, :])   # synthetic normalized pitch output
        log_dur = y[1:2, :]                # synthetic log-duration output

        # --- exact Variance.forward semantics ---
        # pitches = torch.log(pitches * pitch_std + pitch_mean)
        out_ref[0:1, :] = jnp.log(pitch_norm * pitch_std + pitch_mean)
        # durations = clamp((exp(log_dur) - 1) / (sr / hop), min=0.01)
        dur = (jnp.exp(log_dur) - 1.0) * inv_frames_per_second
        out_ref[1:2, :] = jnp.maximum(dur, 0.01)

    return kernel


def init_params(key):
    kp, ka, ks, kw1, kwh = jax.random.split(key, 5)
    scale = 1.0 / jnp.sqrt(jnp.float32(HIDDEN))
    return dict(
        phoneme_emb=jax.random.normal(kp, (VOCAB_PHONEME, HIDDEN), jnp.float32) * scale,
        accent_emb=jax.random.normal(ka, (VOCAB_ACCENT, HIDDEN), jnp.float32) * scale,
        speaker_emb=jax.random.normal(ks, (NUM_SPEAKERS, HIDDEN), jnp.float32) * scale,
        w1=jax.random.normal(kw1, (HIDDEN, HIDDEN), jnp.float32) * scale,
        b1=jnp.zeros((1, HIDDEN), jnp.float32),
        wh=jax.random.normal(kwh, (HIDDEN, 2), jnp.float32) * scale,
        bh=jnp.zeros((1, 2), jnp.float32),
    )


def variance_forward(params, phonemes, accents, speakers):
    """Equivalent of Variance.forward.

    phonemes: int32 (B, T); accents: int32 (B, T); speakers: int32 (B,)
    returns (pitches, durations), each float32 (B, T).
    """
    # TODO(synk): the real PitchAndDurationPredictor (transformer encoder +
    # conv variance predictors) is not defined in the reference source; it is
    # replaced by a synthetic embedding + MLP predictor with identical I/O.

    # --- glue: embedding lookups (gathers) in plain JAX ---
    h = (params["phoneme_emb"][phonemes]
         + params["accent_emb"][accents]
         + params["speaker_emb"][speakers][:, None, :])          # (B, T, H)
    B, T, H = h.shape
    M = B * T

    # Transpose so the long (time) axis sits on lanes; feed as bf16.
    h_t = h.reshape(M, H).T.astype(jnp.bfloat16)                 # (H, M)

    # Pad M up to a lane-dense, tile-aligned extent.
    m_pad = ((M + 127) // 128) * 128
    tile_m = min(MAX_TILE_M, m_pad)
    m_pad = ((m_pad + tile_m - 1) // tile_m) * tile_m
    if m_pad != M:
        h_t = jnp.pad(h_t, ((0, 0), (0, m_pad - M)))

    kernel = make_variance_kernel(
        PITCH_MEAN, PITCH_STD, float(HOP_LENGTH) / float(SAMPLING_RATE)
    )

    out = pl.pallas_call(
        kernel,
        out_shape=jax.ShapeDtypeStruct((2, m_pad), jnp.float32),
        grid=(m_pad // tile_m,),
        in_specs=[
            # activation stream: tiled along M (lanes)
            pl.BlockSpec((H, tile_m), lambda i: (0, i)),
            # weights / biases: constant block index -> VMEM-resident, no re-DMA
            pl.BlockSpec((H, H), lambda i: (0, 0)),
            pl.BlockSpec((H, 1), lambda i: (0, 0)),
            pl.BlockSpec((2, H), lambda i: (0, 0)),
            pl.BlockSpec((2, 1), lambda i: (0, 0)),
        ],
        out_specs=pl.BlockSpec((2, tile_m), lambda i: (0, i)),
        compiler_params=pltpu.CompilerParams(
            dimension_semantics=("parallel",)),
    )(
        h_t,
        params["w1"].T,                      # (H, H)  W1^T
        params["b1"].reshape(HIDDEN, 1),     # (H, 1)  b1^T
        params["wh"].T,                      # (2, H)  Wh^T
        params["bh"].reshape(2, 1),          # (2, 1)  bh^T
    )

    pitches = out[0, :M].reshape(B, T)
    durations = out[1, :M].reshape(B, T)
    return pitches, durations


if __name__ == "__main__":
    key = jax.random.PRNGKey(0)
    k_params, k_ph, k_ac, k_sp = jax.random.split(key, 4)
    params = init_params(k_params)

    B, T = 2, 8
    phonemes = jax.random.randint(k_ph, (B, T), 0, VOCAB_PHONEME, dtype=jnp.int32)
    accents = jax.random.randint(k_ac, (B, T), 0, VOCAB_ACCENT, dtype=jnp.int32)
    speakers = jax.random.randint(k_sp, (B,), 0, NUM_SPEAKERS, dtype=jnp.int32)

    pitches, durations = jax.jit(variance_forward)(params, phonemes, accents, speakers)
    jax.block_until_ready((pitches, durations))

    assert pitches.shape == (B, T) and durations.shape == (B, T)
    assert bool(jnp.all(jnp.isfinite(pitches)))
    assert bool(jnp.all(durations >= 0.01 - 1e-6))
    print("KERNEL_OK")
</pallas_src>

<mosaic_0001>
module attributes {stable_mosaic.version = 11 : i64} {
  func.func @kernel(%arg0: i32, %arg1: memref<32x128xbf16, #tpu.memory_space<vmem>>, %arg2: memref<32x32xf32, #tpu.memory_space<vmem>>, %arg3: memref<32x1xf32, #tpu.memory_space<vmem>>, %arg4: memref<2x32xf32, #tpu.memory_space<vmem>>, %arg5: memref<2x1xf32, #tpu.memory_space<vmem>>, %arg6: memref<2x128xf32, #tpu.memory_space<vmem>>) attributes {dimension_semantics = [#tpu.dimension_semantics<parallel>], iteration_bounds = array<i64: 1>, scalar_prefetch = 0 : i64, scratch_operands = 0 : i64, tpu.core_type = #tpu.core_type<tc>, window_params = [{transform_indices = @transform_0, window_bounds = array<i64: 32, 128>}, {pipeline_mode = #tpu.pipeline_mode<synchronous>, transform_indices = @transform_1, window_bounds = array<i64: 32, 32>}, {pipeline_mode = #tpu.pipeline_mode<synchronous>, transform_indices = @transform_2, window_bounds = array<i64: 32, 1>}, {pipeline_mode = #tpu.pipeline_mode<synchronous>, transform_indices = @transform_3, window_bounds = array<i64: 2, 32>}, {pipeline_mode = #tpu.pipeline_mode<synchronous>, transform_indices = @transform_4, window_bounds = array<i64: 2, 1>}, {transform_indices = @transform_5, window_bounds = array<i64: 2, 128>}]} {
    %c0 = arith.constant 0 : index
    %c0_0 = arith.constant 0 : index
    %0 = vector.load %arg1[%c0, %c0_0] : memref<32x128xbf16, #tpu.memory_space<vmem>>, vector<32x128xbf16>
    %1 = arith.extf %0 : vector<32x128xbf16> to vector<32x128xf32>
    %c0_1 = arith.constant 0 : index
    %c0_2 = arith.constant 0 : index
    %2 = vector.load %arg2[%c0_1, %c0_2] : memref<32x32xf32, #tpu.memory_space<vmem>>, vector<32x32xf32>
    %cst = arith.constant dense<0.000000e+00> : vector<32x128xf32>
    %3 = tpu.matmul %2, %1, %cst {dimension_numbers = #tpu.dot_dimension_numbers<[1], [0], [0], [1], [0, 0, 1, 1], [], []>} : vector<32x32xf32>, vector<32x128xf32>, vector<32x128xf32> -> vector<32x128xf32>
    %c0_3 = arith.constant 0 : index
    %c0_4 = arith.constant 0 : index
    %4 = vector.load %arg3[%c0_3, %c0_4] : memref<32x1xf32, #tpu.memory_space<vmem>>, vector<32x1xf32>
    %5 = vector.broadcast %4 : vector<32x1xf32> to vector<32x128xf32>
    %6 = arith.addf %3, %5 : vector<32x128xf32>
    %7 = math.tanh %6 : vector<32x128xf32>
    %c0_5 = arith.constant 0 : index
    %c0_6 = arith.constant 0 : index
    %8 = vector.load %arg4[%c0_5, %c0_6] : memref<2x32xf32, #tpu.memory_space<vmem>>, vector<2x32xf32>
    %cst_7 = arith.constant dense<0.000000e+00> : vector<2x128xf32>
    %9 = tpu.matmul %8, %7, %cst_7 {dimension_numbers = #tpu.dot_dimension_numbers<[1], [0], [0], [1], [0, 0, 1, 1], [], []>} : vector<2x32xf32>, vector<32x128xf32>, vector<2x128xf32> -> vector<2x128xf32>
    %c0_8 = arith.constant 0 : index
    %c0_9 = arith.constant 0 : index
    %10 = vector.load %arg5[%c0_8, %c0_9] : memref<2x1xf32, #tpu.memory_space<vmem>>, vector<2x1xf32>
    %11 = vector.broadcast %10 : vector<2x1xf32> to vector<2x128xf32>
    %12 = arith.addf %9, %11 : vector<2x128xf32>
    %13 = vector.extract_strided_slice %12 {offsets = [0, 0], sizes = [1, 128], strides = [1, 1]} : vector<2x128xf32> to vector<1x128xf32>
    %14 = math.tanh %13 : vector<1x128xf32>
    %15 = vector.extract_strided_slice %12 {offsets = [1, 0], sizes = [1, 128], strides = [1, 1]} : vector<2x128xf32> to vector<1x128xf32>
    %cst_10 = arith.constant 5.000000e+01 : f32
    %16 = vector.broadcast %cst_10 : f32 to vector<1x128xf32>
    %17 = arith.mulf %14, %16 : vector<1x128xf32>
    %cst_11 = arith.constant 2.000000e+02 : f32
    %18 = vector.broadcast %cst_11 : f32 to vector<1x128xf32>
    %19 = arith.addf %17, %18 : vector<1x128xf32>
    %20 = math.log %19 : vector<1x128xf32>
    %c0_12 = arith.constant 0 : index
    %c0_13 = arith.constant 0 : index
    %21 = vector.load %arg6[%c0_12, %c0_13] : memref<2x128xf32, #tpu.memory_space<vmem>>, vector<1x128xf32>
    tpu.vector_store %arg6[%c0_12, %c0_13], %20 {strides = array<i32>} : memref<2x128xf32, #tpu.memory_space<vmem>>, vector<1x128xf32>,
    %22 = math.exp %15 : vector<1x128xf32>
    %cst_14 = arith.constant 1.000000e+00 : f32
    %23 = vector.broadcast %cst_14 : f32 to vector<1x128xf32>
    %24 = arith.subf %22, %23 : vector<1x128xf32>
    %cst_15 = arith.constant 0.0106666666 : f32
    %25 = vector.broadcast %cst_15 : f32 to vector<1x128xf32>
    %26 = arith.mulf %24, %25 : vector<1x128xf32>
    %cst_16 = arith.constant 0.00999999977 : f32
    %27 = vector.broadcast %cst_16 : f32 to vector<1x128xf32>
    %28 = arith.maximumf %26, %27 : vector<1x128xf32>
    %c1 = arith.constant 1 : index
    %c0_17 = arith.constant 0 : index
    %29 = vector.load %arg6[%c1, %c0_17] : memref<2x128xf32, #tpu.memory_space<vmem>>, vector<1x128xf32>
    tpu.vector_store %arg6[%c1, %c0_17], %28 {strides = array<i32>} : memref<2x128xf32, #tpu.memory_space<vmem>>, vector<1x128xf32>,
    return
  }
  func.func @transform_0(%arg0: i32) -> (i32, i32) {
    %c0_i32 = arith.constant 0 : i32
    %c0_i32_0 = arith.constant 0 : i32
    return %c0_i32, %arg0 : i32, i32
  }
  func.func @transform_1(%arg0: i32) -> (i32, i32) {
    %c0_i32 = arith.constant 0 : i32
    %c0_i32_0 = arith.constant 0 : i32
    %c0_i32_1 = arith.constant 0 : i32
    return %c0_i32, %c0_i32_0 : i32, i32
  }
  func.func @transform_2(%arg0: i32) -> (i32, i32) {
    %c0_i32 = arith.constant 0 : i32
    %c0_i32_0 = arith.constant 0 : i32
    %c0_i32_1 = arith.constant 0 : i32
    return %c0_i32, %c0_i32_0 : i32, i32
  }
  func.func @transform_3(%arg0: i32) -> (i32, i32) {
    %c0_i32 = arith.constant 0 : i32
    %c0_i32_0 = arith.constant 0 : i32
    %c0_i32_1 = arith.constant 0 : i32
    return %c0_i32, %c0_i32_0 : i32, i32
  }
  func.func @transform_4(%arg0: i32) -> (i32, i32) {
    %c0_i32 = arith.constant 0 : i32
    %c0_i32_0 = arith.constant 0 : i32
    %c0_i32_1 = arith.constant 0 : i32
    return %c0_i32, %c0_i32_0 : i32, i32
  }
  func.func @transform_5(%arg0: i32) -> (i32, i32) {
    %c0_i32 = arith.constant 0 : i32
    %c0_i32_0 = arith.constant 0 : i32
    return %c0_i32, %arg0 : i32, i32
  }
}

</mosaic_0001>

<llo_original>
// kernel: squeeze.2
$region0: #{squeeze.2}
  %s0 = inlined_call_operand.vmem [shape: f32[16], index: 0, kind: input, shape index: {}]
  %s1 = inlined_call_operand.hbm [shape: f32[2,8], index: 1, kind: output, shape index: {}]
  $region1: #{squeeze.2} parent=0
    #allocation0 [shape = 'u8[1024]{0}', space=vmem, size = 0x400, scoped, tag = 'operand span for operand 1']
    #allocation1 [shape = 's32[1]{0}', space=sflag, size = 0x4, scoped, tag = 'scoped memory for squeeze.2']
    #allocation2 [shape = 'u8[4096]{0}', space=vmem, size = 0x1000, scoped, tag = 'scoped mem for output reshape']
    #allocation3 [shape = 'u8[4096]{0}', space=vmem, size = 0x1000, scoped, tag = 'scoped mem for input reshape']
    %2 = vsyncpa [#allocation1], 0
    %s4 = sshllo.u32 0, 1
    %v5 = vld [vmem:[%s0] sm:%s4]
    %6 = vst [vmem:[#allocation3] sm:%s4] %v5
    %v7 = vld [vmem:[#allocation3] sm:$0x1]
    %vm8 = vcmask 64512
    %9 = vst.msk [vmem:[#allocation2] sm:$0x1] %vm8, %v7
    %v10 = vld [vmem:[#allocation3] sm:$0x1]
    %11 = vrot.lane.b32.xlu0 %v10, 120
    %v12 = vpop.permute.xlu0 %11
    %vm13 = vcmask 64512
    %s14 = scalar_lea.vmem [#allocation2], 1
    %15 = vst.msk [vmem:[%s14] sm:$0x1] %vm13, %v12
    %s17 = sshllo.u32 0, 2
    %v19 = vld [vmem:[#allocation2] sm:%s17]
    %s20 = sshllo.u32 0, 2
    %21 = vst [vmem:[#allocation0] sm:%s20] %v19
    %s23 = ssub.s32 32, 32
    %24 = vsyncadd [#allocation1], %s23
    %s26 = sshll.u32 [#allocation0], 4
    %s27 = int_to_ptr.vmem [resolvable:$true] %s26
    %29 = dma.vmem_to_hbm [thread:$0]  %s27, 32, %s1, [#allocation1]
    %30 = dma.done [#allocation1], 32
    %31 = vsyncpa [#allocation1], 1

// kernel: variance_forward.1
$region0: #{variance_forward.1}
  #allocation0 [shape = 'u32[]', space=smem, size = 0x4, offset = 0x4, fixed_abs, tag = 'smem constant byte address 0x4 - core index']
  #allocation1 [shape = 'u32[144,128]{1,0:T(1,128)}', space=vmem, size = 0x12000, scoped, tag = 'internal scratch']
  %s0 = inlined_call_operand.vmem [shape: bf16[32,128], index: 0, kind: input, shape index: {}]
  %s1 = inlined_call_operand.vmem [shape: f32[32,32], index: 1, kind: input, shape index: {}]
  %s2 = inlined_call_operand.vmem [shape: f32[32,1], index: 2, kind: input, shape index: {}]
  %s3 = inlined_call_operand.vmem [shape: f32[2,32], index: 3, kind: input, shape index: {}]
  %s4 = inlined_call_operand.vmem [shape: f32[2,1], index: 4, kind: input, shape index: {}]
  %s5 = inlined_call_operand.vmem [shape: f32[2,128], index: 5, kind: output, shape index: {}]
  %s6 = sld [smem:[#allocation0]]
  $region30: #{variance_forward.1} parent=0
    _
  %s8 = ssub.s32 1, %s6
  %s9 = scalar_select 0, %s8, %s6
  // Predicated region
  $region2: #{variance_forward.1} parent=0 // pred_check
    _
  $region3: #{variance_forward.1} parent=0 // pred_check_branch
    %11 = sbr.rel (0) target = $region5
  $region4: #{variance_forward.1} parent=0 // pred_region
    _
  $region5: #{variance_forward.1} parent=0 // pred_fallthru
    _
  // Predicated region
  $region6: #{variance_forward.1} parent=0 // pred_check
    _
  $region7: #{variance_forward.1} parent=0 // pred_check_branch
    %13 = sbr.rel (0) target = $region9
  $region8: #{variance_forward.1} parent=0 // pred_region
    _
  $region9: #{variance_forward.1} parent=0 // pred_fallthru
    _
  // Predicated region
  $region10: #{variance_forward.1} parent=0 // pred_check
    _
  $region11: #{variance_forward.1} parent=0 // pred_check_branch
    %15 = sbr.rel (0) target = $region13
  $region12: #{variance_forward.1} parent=0 // pred_region
    _
  $region13: #{variance_forward.1} parent=0 // pred_fallthru
    _
  // Predicated region
  $region14: #{variance_forward.1} parent=0 // pred_check
    _
  $region15: #{variance_forward.1} parent=0 // pred_check_branch
    %17 = sbr.rel (0) target = $region17
  $region16: #{variance_forward.1} parent=0 // pred_region
    _
  $region17: #{variance_forward.1} parent=0 // pred_fallthru
    _
  // Predicated region
  $region18: #{variance_forward.1} parent=0 // pred_check
    _
  $region19: #{variance_forward.1} parent=0 // pred_check_branch
    %19 = sbr.rel (0) target = $region21
  $region20: #{variance_forward.1} parent=0 // pred_region
    _
  $region21: #{variance_forward.1} parent=0 // pred_fallthru
    _
  %v20 = vld [vmem:[%s0] sm:$0xf]
  %v21 = vld [vmem:[%s0 + $0x4] sm:$0xf]
  %v22 = vld [vmem:[%s0 + $0x8] sm:$0xf]
  %v23 = vld [vmem:[%s0 + $0xc] sm:$0xf]
  %v24 = vunpack.c.l.bf16 %v20
  %v25 = vunpack.c.l.bf16 %v21
  %v26 = vunpack.c.l.bf16 %v22
  %v27 = vunpack.c.l.bf16 %v23
  %v28 = vld [vmem:[%s1] sm:$0xff]
  %v29 = vld [vmem:[%s1 + $0x8] sm:$0xff]
  %v30 = vld [vmem:[%s1 + $0x10] sm:$0xff]
  %v31 = vld [vmem:[%s1 + $0x18] sm:$0xff]
  %v32 = vld [vmem:[%s2] sm:$0xff]
  %v33 = vld [vmem:[%s2 + $0x8] sm:$0xff]
  %v34 = vld [vmem:[%s2 + $0x10] sm:$0xff]
  %v35 = vld [vmem:[%s2 + $0x18] sm:$0xff]
  %37 = vset.pattern.permute.xlu0 0
  %38 = vperm.xlu0 %37, %v32
  %v39 = vpop.permute.xlu0 %38
  %42 = vset.pattern.permute.xlu0 0
  %43 = vperm.xlu0 %42, %v33
  %v44 = vpop.permute.xlu0 %43
  %47 = vset.pattern.permute.xlu0 0
  %48 = vperm.xlu0 %47, %v34
  %v49 = vpop.permute.xlu0 %48
  %52 = vset.pattern.permute.xlu0 0
  %53 = vperm.xlu0 %52, %v35
  %v54 = vpop.permute.xlu0 %53
  %vm56 = vcmask 261120
  %v58 = vsel %vm56, %v28, 0
  %v61 = vsel %vm56, %v29, 0
  %v64 = vsel %vm56, %v30, 0
  %v67 = vsel %vm56, %v31, 0
  %69 = vmatprep.subr.mxu0 0.0
  %70 = vmatpush1.msra.mxu0 %v24
  %71 = vmatprep.subr.mxu0 0.0
  %72 = vmatpush1.msra.mxu0 %v25
  %73 = vmatprep.subr.mxu0 0.0
  %74 = vmatpush1.msra.mxu0 %v26
  %75 = vmatprep.subr.mxu0 0.0
  %76 = vmatpush1.msra.mxu0 %v27
  %77 = vmatprep.subr.mxu0 0.0
  %78 = vmatpush1.msra.mxu0 0.0
  %79 = vmatprep.subr.mxu0 0.0
  %80 = vmatpush1.msra.mxu0 0.0
  %81 = vmatprep.subr.mxu0 0.0
  %82 = vmatpush1.msra.mxu0 0.0
  %83 = vmatprep.subr.mxu0 0.0
  %84 = vmatpush1.msra.mxu0 0.0
  %85 = vmatprep.subr.mxu0 0.0
  %86 = vmatpush1.msra.mxu0 0.0
  %87 = vmatprep.subr.mxu0 0.0
  %88 = vmatpush1.msra.mxu0 0.0
  %89 = vmatprep.subr.mxu0 0.0
  %90 = vmatpush1.msra.mxu0 0.0
  %91 = vmatprep.subr.mxu0 0.0
  %92 = vmatpush1.msra.mxu0 0.0
  %93 = vmatprep.subr.mxu0 0.0
  %94 = vmatpush1.msra.mxu0 0.0
  %95 = vmatprep.subr.mxu0 0.0
  %96 = vmatpush1.msra.mxu0 0.0
  %97 = vmatprep.subr.mxu0 0.0
  %98 = vmatpush1.msra.mxu0 0.0
  %99 = vmatprep.subr.mxu0 0.0
  %100 = vmatpush1.msra.mxu0 0.0
  %101 = vmatprep.subr.mxu0 0.0
  %102 = vmatpush1.msra.mxu0 0.0
  %103 = vmatprep.subr.mxu0 0.0
  %104 = vmatpush1.msra.mxu0 0.0
  %105 = vmatprep.subr.mxu0 0.0
  %106 = vmatpush1.msra.mxu0 0.0
  %107 = vmatprep.subr.mxu0 0.0
  %108 = vmatpush1.msra.mxu0 0.0
  %109 = vmatprep.subr.mxu0 0.0
  %110 = vmatpush1.msra.mxu0 0.0
  %111 = vmatprep.subr.mxu0 0.0
  %112 = vmatpush1.msra.mxu0 0.0
  %113 = vmatprep.subr.mxu0 0.0
  %114 = vmatpush1.msra.mxu0 0.0
  %115 = vmatprep.subr.mxu0 0.0
  %116 = vmatpush1.msra.mxu0 0.0
  %117 = vmatprep.subr.mxu0 0.0
  %118 = vmatpush1.msra.mxu0 0.0
  %119 = vmatprep.subr.mxu0 0.0
  %120 = vmatpush1.msra.mxu0 0.0
  %121 = vmatprep.subr.mxu0 0.0
  %122 = vmatpush1.msra.mxu0 0.0
  %123 = vmatprep.subr.mxu0 0.0
  %124 = vmatpush1.msra.mxu0 0.0
  %125 = vmatprep.subr.mxu0 0.0
  %126 = vmatpush1.msra.mxu0 0.0
  %127 = vmatprep.subr.mxu0 0.0
  %128 = vmatpush1.msra.mxu0 0.0
  %129 = vmatprep.subr.mxu0 0.0
  %130 = vmatpush1.msra.mxu0 0.0
  %131 = vmatprep.subr.mxu0 0.0
  %132 = vmatpush1.msra.mxu0 0.0
  %133 = vmatprep.mubr.f32.mxu0 0.0
  %134 = vmatmul.mubr.f32.gmra.mrb[0].mxu0 %v58
  %v135 = vpop.f32.mrb[0].mxu0
  %v136 = vadd.f32 %v39, %v135
  %v137 = vpop.f32.mrb[0].mxu0
  %138 = vmatprep.mubr.f32.mxu0 0.0
  %139 = vmatmul.mubr.f32.gmra.mrb[0].mxu0 %v61
  %v140 = vpop.f32.mrb[0].mxu0
  %v141 = vadd.f32 %v44, %v140
  %v142 = vpop.f32.mrb[0].mxu0
  %143 = vmatprep.mubr.f32.mxu0 0.0
  %144 = vmatmul.mubr.f32.gmra.mrb[0].mxu0 %v64
  %v145 = vpop.f32.mrb[0].mxu0
  %v146 = vadd.f32 %v49, %v145
  %v147 = vpop.f32.mrb[0].mxu0
  %148 = vmatprep.mubr.f32.mxu0 0.0
  %149 = vmatmul.mubr.f32.gmra.mrb[0].mxu0 %v67
  %v150 = vpop.f32.mrb[0].mxu0
  %v151 = vadd.f32 %v54, %v150
  %v152 = vpop.f32.mrb[0].mxu0
  %153 = vdwg.mxu0
  %v154 = vtanh.pop %v136
  %v155 = vtanh.pop %v141
  %v156 = vtanh.pop %v146
  %v157 = vtanh.pop %v151
  %v158 = vld [vmem:[%s3] sm:$0x3]
  %v159 = vld [vmem:[%s4] sm:$0x3]
  %161 = vset.pattern.permute.xlu0 0
  %162 = vperm.xlu0 %161, %v159
  %v163 = vpop.permute.xlu0 %162
  %v166 = vsel %vm56, %v158, 0
  %168 = vmatprep.subr.mxu0 0.0
  %169 = vmatpush1.msra.mxu0 %v154
  %170 = vmatprep.subr.mxu0 0.0
  %171 = vmatpush1.msra.mxu0 %v155
  %172 = vmatprep.subr.mxu0 0.0
  %173 = vmatpush1.msra.mxu0 %v156
  %174 = vmatprep.subr.mxu0 0.0
  %175 = vmatpush1.msra.mxu0 %v157
  %176 = vmatprep.subr.mxu0 0.0
  %177 = vmatpush1.msra.mxu0 0.0
  %178 = vmatprep.subr.mxu0 0.0
  %179 = vmatpush1.msra.mxu0 0.0
  %180 = vmatprep.subr.mxu0 0.0
  %181 = vmatpush1.msra.mxu0 0.0
  %182 = vmatprep.subr.mxu0 0.0
  %183 = vmatpush1.msra.mxu0 0.0
  %184 = vmatprep.subr.mxu0 0.0
  %185 = vmatpush1.msra.mxu0 0.0
  %186 = vmatprep.subr.mxu0 0.0
  %187 = vmatpush1.msra.mxu0 0.0
  %188 = vmatprep.subr.mxu0 0.0
  %189 = vmatpush1.msra.mxu0 0.0
  %190 = vmatprep.subr.mxu0 0.0
  %191 = vmatpush1.msra.mxu0 0.0
  %192 = vmatprep.subr.mxu0 0.0
  %193 = vmatpush1.msra.mxu0 0.0
  %194 = vmatprep.subr.mxu0 0.0
  %195 = vmatpush1.msra.mxu0 0.0
  %196 = vmatprep.subr.mxu0 0.0
  %197 = vmatpush1.msra.mxu0 0.0
  %198 = vmatprep.subr.mxu0 0.0
  %199 = vmatpush1.msra.mxu0 0.0
  %200 = vmatprep.subr.mxu0 0.0
  %201 = vmatpush1.msra.mxu0 0.0
  %202 = vmatprep.subr.mxu0 0.0
  %203 = vmatpush1.msra.mxu0 0.0
  %204 = vmatprep.subr.mxu0 0.0
  %205 = vmatpush1.msra.mxu0 0.0
  %206 = vmatprep.subr.mxu0 0.0
  %207 = vmatpush1.msra.mxu0 0.0
  %208 = vmatprep.subr.mxu0 0.0
  %209 = vmatpush1.msra.mxu0 0.0
  %210 = vmatprep.subr.mxu0 0.0
  %211 = vmatpush1.msra.mxu0 0.0
  %212 = vmatprep.subr.mxu0 0.0
  %213 = vmatpush1.msra.mxu0 0.0
  %214 = vmatprep.subr.mxu0 0.0
  %215 = vmatpush1.msra.mxu0 0.0
  %216 = vmatprep.subr.mxu0 0.0
  %217 = vmatpush1.msra.mxu0 0.0
  %218 = vmatprep.subr.mxu0 0.0
  %219 = vmatpush1.msra.mxu0 0.0
  %220 = vmatprep.subr.mxu0 0.0
  %221 = vmatpush1.msra.mxu0 0.0
  %222 = vmatprep.subr.mxu0 0.0
  %223 = vmatpush1.msra.mxu0 0.0
  %224 = vmatprep.subr.mxu0 0.0
  %225 = vmatpush1.msra.mxu0 0.0
  %226 = vmatprep.subr.mxu0 0.0
  %227 = vmatpush1.msra.mxu0 0.0
  %228 = vmatprep.subr.mxu0 0.0
  %229 = vmatpush1.msra.mxu0 0.0
  %230 = vmatprep.subr.mxu0 0.0
  %231 = vmatpush1.msra.mxu0 0.0
  %232 = vmatprep.mubr.f32.mxu0 0.0
  %233 = vmatmul.mubr.f32.gmra.mrb[0].mxu0 %v166
  %v234 = vpop.f32.mrb[0].mxu0
  %v235 = vadd.f32 %v163, %v234
  %v236 = vpop.f32.mrb[0].mxu0
  %237 = vdwg.mxu0
  %v238 = vtanh.pop %v235
  %v239 = vmul.f32 %v238, 50.0
  %v240 = vadd.f32 %v239, 200.0
  %v241 = vlog2.pop %v240
  %v242 = vmul.f32 %v241, 0.6931472
  %243 = vst [vmem:[%s5] sm:$0x1] %v242
  %v244 = vmul.f32 %v235, 1.442695
  %v245 = vpow.pop %v244
  %v246 = vsub.f32 %v245, 1.0
  %v247 = vmul.f32 %v246, 0.010666667
  %v248 = vmax.f32 %v247, 0.01
  %249 = vst [vmem:[%s5] sm:$0x2] %v248
  // Predicated region
  $region22: #{variance_forward.1} parent=0 // pred_check
    _
  $region23: #{variance_forward.1} parent=0 // pred_check_branch
    %251 = sbr.rel (0) target = $region25
  $region24: #{variance_forward.1} parent=0 // pred_region
    _
  $region25: #{variance_forward.1} parent=0 // pred_fallthru
    _
  // Predicated region
  $region26: #{variance_forward.1} parent=0 // pred_check
    _
  $region27: #{variance_forward.1} parent=0 // pred_check_branch
    %253 = sbr.rel (0) target = $region29
  $region28: #{variance_forward.1} parent=0 // pred_region
    _
  $region29: #{variance_forward.1} parent=0 // pred_fallthru
    _

</llo_original>
